<compile_context>
chip_gen: v6e
topology: v6e:2x2x1
jax: 0.10.0
libtpu: 0.0.40
codegen_flags: <defaults>
</compile_context>

<pallas_src>
import functools

import jax
import jax.numpy as jnp
from jax.experimental import pallas as pl
from jax.experimental.pallas import tpu as pltpu

LANES = 128
SUBLANES = 8


def _fold_to_vregs(x, tm):
    # (tm, 128) -> (8, 128) using only full-vreg VPU adds; grouping whole
    # sublane tiles keeps the reshape layout-free (no VMEM copy, no XLU).
    return x.reshape(tm // SUBLANES, SUBLANES, LANES).sum(axis=0)


def _masked_nll_kernel(pred_ref, logvar_ref, gt_ref, mask_ref,
                       num_ref, cnt_ref,
                       *, penalty_weight, rows, needs_row_mask):
    c = pl.program_id(0)
    i = pl.program_id(1)
    spc = pl.num_programs(1)
    tm = pred_ref.shape[0]

    @pl.when(i == 0)
    def _():
        num_ref[...] = jnp.zeros_like(num_ref)
        cnt_ref[...] = jnp.zeros_like(cnt_ref)

    logvar = logvar_ref[...]
    diff = pred_ref[...] - gt_ref[...]
    per_elem = jnp.exp(-logvar) * (diff * diff) + penalty_weight * logvar
    m = mask_ref[...].astype(jnp.float32)

    num_term = per_elem * m
    cnt_term = m
    if needs_row_mask:
        # Rows past the real slab (partial last block / clamped duplicate block
        # on the second core) hold unspecified VMEM data -> drop them.
        row_start = (c * spc + i) * tm
        row_ids = row_start + jax.lax.broadcasted_iota(jnp.int32, (tm, LANES), 0)
        row_valid = row_ids < rows
        num_term = jnp.where(row_valid, num_term, 0.0)
        cnt_term = jnp.where(row_valid, cnt_term, 0.0)

    num_ref[...] += _fold_to_vregs(num_term, tm)
    cnt_ref[...] += _fold_to_vregs(cnt_term, tm)


def _nll_kernel_nomask(pred_ref, logvar_ref, gt_ref, num_ref,
                       *, penalty_weight, rows, needs_row_mask):
    c = pl.program_id(0)
    i = pl.program_id(1)
    spc = pl.num_programs(1)
    tm = pred_ref.shape[0]

    @pl.when(i == 0)
    def _():
        num_ref[...] = jnp.zeros_like(num_ref)

    logvar = logvar_ref[...]
    diff = pred_ref[...] - gt_ref[...]
    per_elem = jnp.exp(-logvar) * (diff * diff) + penalty_weight * logvar

    num_term = per_elem
    if needs_row_mask:
        row_start = (c * spc + i) * tm
        row_ids = row_start + jax.lax.broadcasted_iota(jnp.int32, (tm, LANES), 0)
        row_valid = row_ids < rows
        num_term = jnp.where(row_valid, num_term, 0.0)

    num_ref[...] += _fold_to_vregs(num_term, tm)


def base_loss(pred_depth, pred_logvar, gt_depth, valid_mask=None,
              eps=1e-6, penalty_weight=1.0, *, tile_rows=4096):
    """All map inputs are (B, 1, H, W). Returns a scalar float32 loss."""
    assert pred_depth.shape == pred_logvar.shape == gt_depth.shape
    n = pred_depth.size
    has_mask = valid_mask is not None
    n_inputs = 4 if has_mask else 3

    # Lane-dense (rows, 128) slab. Pad with zeros only when needed (common
    # depth-map sizes have n % 1024 == 0, i.e. zero extra HBM traffic).
    pad_unit = SUBLANES * LANES
    n_pad = ((n + pad_unit - 1) // pad_unit) * pad_unit
    pad = n_pad - n
    rows = n_pad // LANES

    def to_slab(x, keep_dtype=False):
        x = x.reshape(-1)
        if not keep_dtype and x.dtype != jnp.float32:
            x = x.astype(jnp.float32)
        if pad:
            x = jnp.pad(x, (0, pad))
        return x.reshape(rows, LANES)

    inputs = [to_slab(pred_depth), to_slab(pred_logvar), to_slab(gt_depth)]
    if has_mask:
        m = valid_mask
        if m.dtype == jnp.bool_:
            m = m.astype(jnp.int8)  # 1 B/elem HBM stream; widened in-kernel
        inputs.append(to_slab(m, keep_dtype=True))

    # Tile selection: as big as the VMEM budget allows (n_inputs blocks,
    # double-buffered, f32 worst case). Budget fits v7x's smaller VMEM.
    vmem_budget_bytes = 24 * 1024 * 1024
    max_tm = vmem_budget_bytes // (n_inputs * 2 * LANES * 4)
    tm = min(int(tile_rows), max_tm, rows)
    if tm < rows:
        # Multiple of 32 sublanes so int8 mask blocks stay layout-legal
        # (full-array blocks are exempt).
        tm = min(max(32, (tm // 32) * 32), rows)

    nblocks = pl.cdiv(rows, tm)
    ncores = 2 if nblocks > 1 else 1      # v7x: shard row blocks over both TCs
    spc = pl.cdiv(nblocks, ncores)        # grid steps per core
    # Mask rows only if the grid overshoots the slab (partial / dup blocks).
    needs_row_mask = (ncores * spc * tm) != rows

    def in_map(c, i):
        # Clamp so a duplicated trailing step (odd nblocks, second core) never
        # DMAs out of bounds; its contribution is zeroed in-kernel.
        return (jnp.minimum(c * spc + i, nblocks - 1), 0)

    tile_spec = pl.BlockSpec((tm, LANES), in_map)
    # Per-core (8,128) accumulator block: constant along i => stays resident
    # in VMEM across the whole reduction, single unmasked writeback per core.
    acc_spec = pl.BlockSpec((SUBLANES, LANES), lambda c, i: (c, 0))
    acc_shape = jax.ShapeDtypeStruct((ncores * SUBLANES, LANES), jnp.float32)

    compiler_params = pltpu.CompilerParams(
        dimension_semantics=("parallel", "arbitrary"),
        vmem_limit_bytes=32 * 1024 * 1024)

    if has_mask:
        kernel = functools.partial(_masked_nll_kernel,
                                   penalty_weight=float(penalty_weight),
                                   rows=rows,
                                   needs_row_mask=needs_row_mask)
        num_p, cnt_p = pl.pallas_call(
            kernel,
            out_shape=(acc_shape, acc_shape),
            grid_spec=pltpu.PrefetchScalarGridSpec(
                num_scalar_prefetch=0,
                grid=(ncores, spc),
                in_specs=[tile_spec] * 4,
                out_specs=(acc_spec, acc_spec)),
            compiler_params=compiler_params,
        )(*inputs)
        num = jnp.sum(num_p)
        cnt = jnp.sum(cnt_p)
    else:
        kernel = functools.partial(_nll_kernel_nomask,
                                   penalty_weight=float(penalty_weight),
                                   rows=rows,
                                   needs_row_mask=needs_row_mask)
        num_p = pl.pallas_call(
            kernel,
            out_shape=acc_shape,
            grid_spec=pltpu.PrefetchScalarGridSpec(
                num_scalar_prefetch=0,
                grid=(ncores, spc),
                in_specs=[tile_spec] * 3,
                out_specs=acc_spec),
            compiler_params=compiler_params,
        )(*inputs)
        num = jnp.sum(num_p)
        cnt = jnp.float32(n)   # analytic count; padded zeros add 0 to num

    return num / jnp.maximum(cnt, jnp.float32(eps))


def _reference(pred_depth, pred_logvar, gt_depth, valid_mask, eps, penalty_weight):
    diff = pred_depth - gt_depth
    per_elem = jnp.exp(-pred_logvar) * diff * diff + penalty_weight * pred_logvar
    num = jnp.sum(per_elem * valid_mask)
    cnt = jnp.sum(valid_mask)
    return num / jnp.maximum(cnt, eps)


if __name__ == "__main__":
    key = jax.random.PRNGKey(0)
    k1, k2, k3, k4 = jax.random.split(key, 4)

    eps = 1e-6
    pw = 1.0

    # 1) masked path, bool mask streamed as int8 -------------------------------
    B, C, H, W = 2, 1, 16, 16
    pred_depth = jax.random.uniform(k1, (B, C, H, W), jnp.float32, 0.1, 10.0)
    pred_logvar = jax.random.normal(k2, (B, C, H, W), jnp.float32) * 0.5
    gt_depth = jax.random.uniform(k3, (B, C, H, W), jnp.float32, 0.1, 10.0)
    valid_mask_bool = jax.random.uniform(k4, (B, C, H, W)) > 0.2

    out = jax.block_until_ready(
        base_loss(pred_depth, pred_logvar, gt_depth, valid_mask_bool,
                  eps=eps, penalty_weight=pw))
    ref = _reference(pred_depth, pred_logvar, gt_depth,
                     valid_mask_bool.astype(jnp.float32), eps, pw)
    assert jnp.allclose(out, ref, rtol=1e-5, atol=1e-5), (out, ref)

    # 2) no-mask fast path (3-input kernel, analytic count) --------------------
    out2 = jax.block_until_ready(
        base_loss(pred_depth, pred_logvar, gt_depth, None,
                  eps=eps, penalty_weight=pw))
    ref2 = _reference(pred_depth, pred_logvar, gt_depth,
                      jnp.ones_like(pred_depth), eps, pw)
    assert jnp.allclose(out2, ref2, rtol=1e-5, atol=1e-5), (out2, ref2)

    # 3) ragged shape: pad path + partial block + odd block count + 2-core split
    B3, H3, W3 = 2, 40, 127           # n = 10160 -> padded slab, 3 blocks of 32
    p3 = jax.random.uniform(k1, (B3, 1, H3, W3), jnp.float32, 0.1, 10.0)
    lv3 = jax.random.normal(k2, (B3, 1, H3, W3), jnp.float32) * 0.5
    g3 = jax.random.uniform(k3, (B3, 1, H3, W3), jnp.float32, 0.1, 10.0)
    m3 = jax.random.uniform(k4, (B3, 1, H3, W3)) > 0.5
    out3 = jax.block_until_ready(
        base_loss(p3, lv3, g3, m3, eps=eps, penalty_weight=pw, tile_rows=32))
    ref3 = _reference(p3, lv3, g3, m3.astype(jnp.float32), eps, pw)
    assert jnp.allclose(out3, ref3, rtol=1e-5, atol=1e-5), (out3, ref3)

    print("KERNEL_OK")
</pallas_src>

<mosaic_0001>
module attributes {stable_mosaic.version = 11 : i64} {
  func.func @_masked_nll_kernel(%arg0: i32, %arg1: i32, %arg2: memref<8x128xf32, #tpu.memory_space<vmem>>, %arg3: memref<8x128xf32, #tpu.memory_space<vmem>>, %arg4: memref<8x128xf32, #tpu.memory_space<vmem>>, %arg5: memref<8x128xi8, #tpu.memory_space<vmem>>, %arg6: memref<8x128xf32, #tpu.memory_space<vmem>>, %arg7: memref<8x128xf32, #tpu.memory_space<vmem>>) attributes {dimension_semantics = [#tpu.dimension_semantics<parallel>, #tpu.dimension_semantics<arbitrary>], iteration_bounds = array<i64: 1, 1>, scalar_prefetch = 0 : i64, scratch_operands = 0 : i64, tpu.core_type = #tpu.core_type<tc>, window_params = [{transform_indices = @transform_0, window_bounds = array<i64: 8, 128>}, {transform_indices = @transform_1, window_bounds = array<i64: 8, 128>}, {transform_indices = @transform_2, window_bounds = array<i64: 8, 128>}, {transform_indices = @transform_3, window_bounds = array<i64: 8, 128>}, {transform_indices = @transform_4, window_bounds = array<i64: 8, 128>}, {transform_indices = @transform_5, window_bounds = array<i64: 8, 128>}]} {
    %c0_i32 = arith.constant 0 : i32
    %0 = arith.cmpi eq, %arg1, %c0_i32 : i32
    %1 = arith.extui %0 : i1 to i32
    %c0_i32_0 = arith.constant 0 : i32
    %2 = arith.cmpi ne, %1, %c0_i32_0 : i32
    scf.if %2 {
      %cst_19 = arith.constant 0.000000e+00 : f32
      %28 = vector.broadcast %cst_19 : f32 to vector<8x128xf32>
      %c0_20 = arith.constant 0 : index
      %c0_21 = arith.constant 0 : index
      %29 = vector.load %arg6[%c0_20, %c0_21] : memref<8x128xf32, #tpu.memory_space<vmem>>, vector<8x128xf32>
      tpu.vector_store %arg6[%c0_20, %c0_21], %28 {strides = array<i32>} : memref<8x128xf32, #tpu.memory_space<vmem>>, vector<8x128xf32>,
      %cst_22 = arith.constant 0.000000e+00 : f32
      %30 = vector.broadcast %cst_22 : f32 to vector<8x128xf32>
      %c0_23 = arith.constant 0 : index
      %c0_24 = arith.constant 0 : index
      %31 = vector.load %arg7[%c0_23, %c0_24] : memref<8x128xf32, #tpu.memory_space<vmem>>, vector<8x128xf32>
      tpu.vector_store %arg7[%c0_23, %c0_24], %30 {strides = array<i32>} : memref<8x128xf32, #tpu.memory_space<vmem>>, vector<8x128xf32>,
    } else {
    }
    %c0 = arith.constant 0 : index
    %c0_1 = arith.constant 0 : index
    %3 = vector.load %arg3[%c0, %c0_1] : memref<8x128xf32, #tpu.memory_space<vmem>>, vector<8x128xf32>
    %c0_2 = arith.constant 0 : index
    %c0_3 = arith.constant 0 : index
    %4 = vector.load %arg2[%c0_2, %c0_3] : memref<8x128xf32, #tpu.memory_space<vmem>>, vector<8x128xf32>
    %c0_4 = arith.constant 0 : index
    %c0_5 = arith.constant 0 : index
    %5 = vector.load %arg4[%c0_4, %c0_5] : memref<8x128xf32, #tpu.memory_space<vmem>>, vector<8x128xf32>
    %6 = arith.subf %4, %5 : vector<8x128xf32>
    %cst = arith.constant 0.000000e+00 : f32
    %7 = vector.broadcast %cst : f32 to vector<8x128xf32>
    %8 = arith.subf %7, %3 : vector<8x128xf32>
    %9 = math.exp %8 : vector<8x128xf32>
    %10 = arith.mulf %6, %6 : vector<8x128xf32>
    %11 = arith.mulf %9, %10 : vector<8x128xf32>
    %cst_6 = arith.constant 1.000000e+00 : f32
    %12 = vector.broadcast %cst_6 : f32 to vector<8x128xf32>
    %13 = arith.mulf %12, %3 : vector<8x128xf32>
    %14 = arith.addf %11, %13 : vector<8x128xf32>
    %c0_7 = arith.constant 0 : index
    %c0_8 = arith.constant 0 : index
    %15 = vector.load %arg5[%c0_7, %c0_8] : memref<8x128xi8, #tpu.memory_space<vmem>>, vector<8x128xi8>
    %16 = arith.sitofp %15 : vector<8x128xi8> to vector<8x128xf32>
    %17 = arith.mulf %14, %16 : vector<8x128xf32>
    %c0_9 = arith.constant 0 : index
    %c0_10 = arith.constant 0 : index
    %18 = vector.load %arg6[%c0_9, %c0_10] : memref<8x128xf32, #tpu.memory_space<vmem>>, vector<8x128xf32>
    %19 = vector.shape_cast %17 : vector<8x128xf32> to vector<1x8x128xf32>
    %cst_11 = arith.constant dense<0.000000e+00> : vector<8x128xf32>
    %20 = vector.multi_reduction <add>, %19, %cst_11 [0] : vector<1x8x128xf32> to vector<8x128xf32>
    %21 = arith.addf %18, %20 : vector<8x128xf32>
    %c0_12 = arith.constant 0 : index
    %c0_13 = arith.constant 0 : index
    %22 = vector.load %arg6[%c0_12, %c0_13] : memref<8x128xf32, #tpu.memory_space<vmem>>, vector<8x128xf32>
    tpu.vector_store %arg6[%c0_12, %c0_13], %21 {strides = array<i32>} : memref<8x128xf32, #tpu.memory_space<vmem>>, vector<8x128xf32>,
    %c0_14 = arith.constant 0 : index
    %c0_15 = arith.constant 0 : index
    %23 = vector.load %arg7[%c0_14, %c0_15] : memref<8x128xf32, #tpu.memory_space<vmem>>, vector<8x128xf32>
    %24 = vector.shape_cast %16 : vector<8x128xf32> to vector<1x8x128xf32>
    %cst_16 = arith.constant dense<0.000000e+00> : vector<8x128xf32>
    %25 = vector.multi_reduction <add>, %24, %cst_16 [0] : vector<1x8x128xf32> to vector<8x128xf32>
    %26 = arith.addf %23, %25 : vector<8x128xf32>
    %c0_17 = arith.constant 0 : index
    %c0_18 = arith.constant 0 : index
    %27 = vector.load %arg7[%c0_17, %c0_18] : memref<8x128xf32, #tpu.memory_space<vmem>>, vector<8x128xf32>
    tpu.vector_store %arg7[%c0_17, %c0_18], %26 {strides = array<i32>} : memref<8x128xf32, #tpu.memory_space<vmem>>, vector<8x128xf32>,
    return
  }
  func.func @transform_0(%arg0: i32, %arg1: i32) -> (i32, i32) {
    %c1_i32 = arith.constant 1 : i32
    %0 = arith.muli %arg0, %c1_i32 : i32
    %1 = arith.addi %0, %arg1 : i32
    %c0_i32 = arith.constant 0 : i32
    %2 = arith.minsi %1, %c0_i32 : i32
    %c0_i32_0 = arith.constant 0 : i32
    %c0_i32_1 = arith.constant 0 : i32
    return %2, %c0_i32_0 : i32, i32
  }
  func.func @transform_1(%arg0: i32, %arg1: i32) -> (i32, i32) {
    %c1_i32 = arith.constant 1 : i32
    %0 = arith.muli %arg0, %c1_i32 : i32
    %1 = arith.addi %0, %arg1 : i32
    %c0_i32 = arith.constant 0 : i32
    %2 = arith.minsi %1, %c0_i32 : i32
    %c0_i32_0 = arith.constant 0 : i32
    %c0_i32_1 = arith.constant 0 : i32
    return %2, %c0_i32_0 : i32, i32
  }
  func.func @transform_2(%arg0: i32, %arg1: i32) -> (i32, i32) {
    %c1_i32 = arith.constant 1 : i32
    %0 = arith.muli %arg0, %c1_i32 : i32
    %1 = arith.addi %0, %arg1 : i32
    %c0_i32 = arith.constant 0 : i32
    %2 = arith.minsi %1, %c0_i32 : i32
    %c0_i32_0 = arith.constant 0 : i32
    %c0_i32_1 = arith.constant 0 : i32
    return %2, %c0_i32_0 : i32, i32
  }
  func.func @transform_3(%arg0: i32, %arg1: i32) -> (i32, i32) {
    %c1_i32 = arith.constant 1 : i32
    %0 = arith.muli %arg0, %c1_i32 : i32
    %1 = arith.addi %0, %arg1 : i32
    %c0_i32 = arith.constant 0 : i32
    %2 = arith.minsi %1, %c0_i32 : i32
    %c0_i32_0 = arith.constant 0 : i32
    %c0_i32_1 = arith.constant 0 : i32
    return %2, %c0_i32_0 : i32, i32
  }
  func.func @transform_4(%arg0: i32, %arg1: i32) -> (i32, i32) {
    %c0_i32 = arith.constant 0 : i32
    %c0_i32_0 = arith.constant 0 : i32
    return %arg0, %c0_i32 : i32, i32
  }
  func.func @transform_5(%arg0: i32, %arg1: i32) -> (i32, i32) {
    %c0_i32 = arith.constant 0 : i32
    %c0_i32_0 = arith.constant 0 : i32
    return %arg0, %c0_i32 : i32, i32
  }
}

</mosaic_0001>

<llo_original>
// kernel: tpu_custom_call.1
$region0: #{tpu_custom_call.1}
  #allocation0 [shape = 'u32[]', space=smem, size = 0x4, offset = 0x4, fixed_abs, tag = 'smem constant byte address 0x4 - core index']
  #allocation1 [shape = 'u32[144,128]{1,0:T(1,128)}', space=vmem, size = 0x12000, scoped, tag = 'internal scratch']
  %s0 = inlined_call_operand.hbm [shape: f32[8,128], index: 0, kind: input, shape index: {}]
  %s1 = inlined_call_operand.hbm [shape: f32[8,128], index: 1, kind: input, shape index: {}]
  %s2 = inlined_call_operand.hbm [shape: f32[8,128], index: 2, kind: input, shape index: {}]
  %s3 = inlined_call_operand.vmem [shape: s8[8,128], index: 3, kind: input, shape index: {}]
  %s4 = inlined_call_operand.hbm [shape: f32[8,128], index: 4, kind: output, shape index: {0}]
  %s5 = inlined_call_operand.hbm [shape: f32[8,128], index: 5, kind: output, shape index: {1}]
  %6 = xla_tuple %s4, %s5
  %s7 = sld [smem:[#allocation0]]
  $region50: #{tpu_custom_call.1} parent=0
    _
  %s9 = ssub.s32 1, %s7
  %s10 = scalar_select 0, %s9, %s7
  $region1: #{tpu_custom_call.1} parent=0
    #allocation2 [shape = 'u8[4096]{0}', space=vmem, size = 0x1000, scoped, tag = 'input window, operand 0, single buffered']
    #allocation3 [shape = 's32[1]{0}', space=sflag, size = 0x4, scoped, tag = 'scoped memory for tpu_custom_call.1']
    #allocation4 [shape = 's32[1]{0}', space=sflag, size = 0x4, scoped, tag = 'scoped memory for tpu_custom_call.1']
    #allocation5 [shape = 'u8[4096]{0}', space=vmem, size = 0x1000, scoped, tag = 'input window, operand 1, single buffered']
    #allocation6 [shape = 's32[1]{0}', space=sflag, size = 0x4, scoped, tag = 'scoped memory for tpu_custom_call.1']
    #allocation7 [shape = 'u8[4096]{0}', space=vmem, size = 0x1000, scoped, tag = 'input window, operand 2, single buffered']
    #allocation8 [shape = 'u8[4096]{0}', space=vmem, size = 0x1000, scoped, tag = 'output window, operand 0, single buffered']
    #allocation9 [shape = 'u8[4096]{0}', space=vmem, size = 0x1000, scoped, tag = 'output window, operand 1, single buffered']
    #allocation10 [shape = 's32[1]{0}', space=sflag, size = 0x4, scoped, tag = 'scoped memory for tpu_custom_call.1']
    %11 = vsyncpa [#allocation3], 0
    %12 = vsyncpa [#allocation6], 0
    %13 = vsyncpa [#allocation4], 0
    %14 = vsyncpa [#allocation10], 0
    // Predicated region
    $region2: #{tpu_custom_call.1} parent=1 // pred_check
      _
    $region3: #{tpu_custom_call.1} parent=1 // pred_check_branch
      %16 = sbr.rel (0) target = $region5
    $region4: #{tpu_custom_call.1} parent=1 // pred_region
      %s17 = sadd.s32 0, 0
      %p18 = scmp.lt.s32.totalorder %s17, 0
      %s19 = scalar_select %p18, %s17, 0
      %s21 = ssub.s32 128, 128
      %22 = vsyncadd [#allocation3], %s21
      %s23 = smul.addr %s19, 128
      %s24 = scalar_lea.hbm %s0, %s23
      %s26 = sshll.u32 [#allocation2], 4
      %s27 = int_to_ptr.vmem [resolvable:$true] %s26
      %29 = dma.hbm_to_vmem [thread:$0]  %s24, 128, %s27, [#allocation3]
    $region5: #{tpu_custom_call.1} parent=1 // pred_fallthru
      _
    // Predicated region
    $region6: #{tpu_custom_call.1} parent=1 // pred_check
      _
    $region7: #{tpu_custom_call.1} parent=1 // pred_check_branch
      %31 = sbr.rel (0) target = $region9
    $region8: #{tpu_custom_call.1} parent=1 // pred_region
      %s32 = sadd.s32 0, 0
      %p33 = scmp.lt.s32.totalorder %s32, 0
      %s34 = scalar_select %p33, %s32, 0
      %s36 = ssub.s32 128, 128
      %37 = vsyncadd [#allocation6], %s36
      %s38 = smul.addr %s34, 128
      %s39 = scalar_lea.hbm %s1, %s38
      %s41 = sshll.u32 [#allocation5], 4
      %s42 = int_to_ptr.vmem [resolvable:$true] %s41
      %44 = dma.hbm_to_vmem [thread:$0]  %s39, 128, %s42, [#allocation6]
    $region9: #{tpu_custom_call.1} parent=1 // pred_fallthru
      _
    // Predicated region
    $region10: #{tpu_custom_call.1} parent=1 // pred_check
      _
    $region11: #{tpu_custom_call.1} parent=1 // pred_check_branch
      %46 = sbr.rel (0) target = $region13
    $region12: #{tpu_custom_call.1} parent=1 // pred_region
      %s47 = sadd.s32 0, 0
      %p48 = scmp.lt.s32.totalorder %s47, 0
      %s49 = scalar_select %p48, %s47, 0
      %s51 = ssub.s32 128, 128
      %52 = vsyncadd [#allocation6], %s51
      %s53 = smul.addr %s49, 128
      %s54 = scalar_lea.hbm %s2, %s53
      %s56 = sshll.u32 [#allocation7], 4
      %s57 = int_to_ptr.vmem [resolvable:$true] %s56
      %59 = dma.hbm_to_vmem [thread:$0]  %s54, 128, %s57, [#allocation6]
    $region13: #{tpu_custom_call.1} parent=1 // pred_fallthru
      _
    // Predicated region
    $region14: #{tpu_custom_call.1} parent=1 // pred_check
      _
    $region15: #{tpu_custom_call.1} parent=1 // pred_check_branch
      %61 = sbr.rel (0) target = $region17
    $region16: #{tpu_custom_call.1} parent=1 // pred_region
      %s62 = sadd.s32 0, 0
      %p63 = scmp.lt.s32.totalorder %s62, 0
      %s64 = scalar_select %p63, %s62, 0
      %p65 = scmp.lt.s32.totalorder %s64, 0
      %s66 = scalar_select %p65, %s64, 0
      %s67 = smul.addr %s66, 2
      %s68 = scalar_lea.vmem %s3, %s67
      %s69 = sadd.s32 0, 0
      %p70 = scmp.lt.s32.totalorder %s69, 0
      %s71 = scalar_select %p70, %s69, 0
    $region17: #{tpu_custom_call.1} parent=1 // pred_fallthru
      _
    // Predicated region
    $region18: #{tpu_custom_call.1} parent=1 // pred_check
      _
    $region19: #{tpu_custom_call.1} parent=1 // pred_check_branch
      %73 = sbr.rel (0) target = $region21
    $region20: #{tpu_custom_call.1} parent=1 // pred_region
      %74 = dma.done [#allocation3], 128
    $region21: #{tpu_custom_call.1} parent=1 // pred_fallthru
      _
    // Predicated region
    $region22: #{tpu_custom_call.1} parent=1 // pred_check
      _
    $region23: #{tpu_custom_call.1} parent=1 // pred_check_branch
      %76 = sbr.rel (0) target = $region25
    $region24: #{tpu_custom_call.1} parent=1 // pred_region
      %77 = dma.done [#allocation6], 128
    $region25: #{tpu_custom_call.1} parent=1 // pred_fallthru
      _
    // Predicated region
    $region26: #{tpu_custom_call.1} parent=1 // pred_check
      _
    $region27: #{tpu_custom_call.1} parent=1 // pred_check_branch
      %79 = sbr.rel (0) target = $region29
    $region28: #{tpu_custom_call.1} parent=1 // pred_region
      %80 = dma.done [#allocation6], 128
    $region29: #{tpu_custom_call.1} parent=1 // pred_fallthru
      _
    %s81 = sadd.s32 0, 0
    %p82 = scmp.lt.s32.totalorder %s81, 0
    %s83 = scalar_select %p82, %s81, 0
    %p84 = scmp.lt.s32.totalorder %s83, 0
    %s85 = scalar_select %p84, %s83, 0
    %s86 = smul.addr %s85, 2
    %s87 = scalar_lea.vmem %s3, %s86
    %s88 = sadd.s32 0, 0
    %p89 = scmp.lt.s32.totalorder %s88, 0
    %s90 = scalar_select %p89, %s88, 0
    %s91 = sadd.s32 0, 0
    %p92 = scmp.lt.s32.totalorder %s91, 0
    %s93 = scalar_select %p92, %s91, 0
    %s94 = sadd.s32 0, 0
    %p95 = scmp.lt.s32.totalorder %s94, 0
    %s96 = scalar_select %p95, %s94, 0
    %s97 = sadd.s32 0, 0
    %p98 = scmp.lt.s32.totalorder %s97, 0
    %s99 = scalar_select %p98, %s97, 0
    %p100 = scmp.lt.s32.totalorder %s99, 0
    %s101 = scalar_select %p100, %s99, 0
    %s102 = smul.addr %s101, 2
    %s103 = scalar_lea.vmem %s3, %s102
    %s104 = sadd.s32 0, 0
    %p105 = scmp.lt.s32.totalorder %s104, 0
    %s106 = scalar_select %p105, %s104, 0
    %p107 = scmp.eq.s32.totalorder 0, 0
    // Predicated region
    $region30: #{tpu_custom_call.1} parent=1 // pred_check
      %p108 = pneg %p107
    $region31: #{tpu_custom_call.1} parent=1 // pred_check_branch
      %110 = sbr.rel (%p108) target = $region33
    $region32: #{tpu_custom_call.1} parent=1 // pred_region
      %111 = vst [vmem:[#allocation8] sm:$0xff] 0.0
      %112 = vst [vmem:[#allocation9] sm:$0xff] 0.0
    $region33: #{tpu_custom_call.1} parent=1 // pred_fallthru
      _
    %v113 = vld [vmem:[#allocation5] sm:$0xff]
    %v114 = vld [vmem:[#allocation2] sm:$0xff]
    %v115 = vld [vmem:[#allocation7] sm:$0xff]
    %v116 = vsub.f32 %v114, %v115
    %v117 = vsub.f32 0.0, %v113
    %v118 = vmul.f32 %v117, 1.442695
    %v119 = vpow.pop %v118
    %v120 = vmul.f32 %v116, %v116
    %v121 = vmul.f32 %v119, %v120
    %v122 = vadd.f32 %v121, %v113
    %v123 = vld [vmem:[%s103] sm:$0x3]
    %v124 = vunpack.c.0.s8 %v123
    %v125 = vcvt.s32.f32 %v124
    %v126 = vmul.f32 %v122, %v125
    %v127 = vld [vmem:[#allocation8] sm:$0xff]
    %v128 = vadd.f32 %v126, 0.0
    %v129 = vadd.f32 %v127, %v128
    %130 = vst [vmem:[#allocation8] sm:$0xff] %v129
    %v131 = vld [vmem:[#allocation9] sm:$0xff]
    %v132 = vadd.f32 %v125, 0.0
    %v133 = vadd.f32 %v131, %v132
    %134 = vst [vmem:[#allocation9] sm:$0xff] %v133
    // Predicated region
    $region34: #{tpu_custom_call.1} parent=1 // pred_check
      _
    $region35: #{tpu_custom_call.1} parent=1 // pred_check_branch
      %136 = sbr.rel (0) target = $region37
    $region36: #{tpu_custom_call.1} parent=1 // pred_region
      %s138 = ssub.s32 128, 128
      %139 = vsyncadd [#allocation4], %s138
      %s141 = sshll.u32 [#allocation8], 4
      %s142 = int_to_ptr.vmem [resolvable:$true] %s141
      %144 = dma.vmem_to_hbm [thread:$0]  %s142, 128, %s4, [#allocation4]
    $region37: #{tpu_custom_call.1} parent=1 // pred_fallthru
      _
    // Predicated region
    $region38: #{tpu_custom_call.1} parent=1 // pred_check
      _
    $region39: #{tpu_custom_call.1} parent=1 // pred_check_branch
      %146 = sbr.rel (0) target = $region41
    $region40: #{tpu_custom_call.1} parent=1 // pred_region
      %s148 = ssub.s32 128, 128
      %149 = vsyncadd [#allocation10], %s148
      %s151 = sshll.u32 [#allocation9], 4
      %s152 = int_to_ptr.vmem [resolvable:$true] %s151
      %154 = dma.vmem_to_hbm [thread:$0]  %s152, 128, %s5, [#allocation10]
    $region41: #{tpu_custom_call.1} parent=1 // pred_fallthru
      _
    // Predicated region
    $region42: #{tpu_custom_call.1} parent=1 // pred_check
      _
    $region43: #{tpu_custom_call.1} parent=1 // pred_check_branch
      %156 = sbr.rel (0) target = $region45
    $region44: #{tpu_custom_call.1} parent=1 // pred_region
      %157 = dma.done [#allocation4], 128
    $region45: #{tpu_custom_call.1} parent=1 // pred_fallthru
      _
    // Predicated region
    $region46: #{tpu_custom_call.1} parent=1 // pred_check
      _
    $region47: #{tpu_custom_call.1} parent=1 // pred_check_branch
      %159 = sbr.rel (0) target = $region49
    $region48: #{tpu_custom_call.1} parent=1 // pred_region
      %160 = dma.done [#allocation10], 128
    $region49: #{tpu_custom_call.1} parent=1 // pred_fallthru
      _
    %161 = vsyncpa [#allocation3], 1
    %162 = vsyncpa [#allocation6], 1
    %163 = vsyncpa [#allocation4], 1
    %164 = vsyncpa [#allocation10], 1

</llo_original>
